<compile_context>
chip_gen: v6e
topology: v6e:2x2x1
jax: 0.10.0
libtpu: 0.0.40
codegen_flags: <defaults>
</compile_context>

<pallas_src>
import functools

import jax
import jax.numpy as jnp
from jax.experimental import pallas as pl
from jax.experimental.pallas import tpu as pltpu

_MIB = 1024 * 1024
_MAX_STEP_BYTES = 8 * _MIB          # combined feat+A(+centers_batch) per grid step
_FALLBACK_VMEM_BYTES = 64 * _MIB    # assume the smallest generation (v7x per-TC)


def _round_up(x, m):
    return ((x + m - 1) // m) * m


def _vmem_capacity_bytes():
    """Per-TensorCore VMEM capacity; conservative fallback if the query fails."""
    try:
        cap = getattr(pltpu.get_tpu_info(), "vmem_capacity_bytes", None)
        if cap:
            return int(cap)
    except Exception:
        pass
    return _FALLBACK_VMEM_BYTES


# --------------------------------------------------------------------------- #
# kernels
# --------------------------------------------------------------------------- #
def _partial_rowsum(feat, a, centers_b, *, batch, block_rows, ragged):
    """Elementwise loss terms on one (TB, D) tile -> (1, D) f32 partial sum."""
    low_prec = (feat.dtype == jnp.bfloat16 and a.dtype == jnp.bfloat16
                and centers_b.dtype == jnp.bfloat16)
    if low_prec:
        # bf16 VPU path (packed vregs): halves VALU work on v6e/v7x; upcast only
        # for the cross-row accumulation.
        diff = feat - centers_b
        p = (a * diff * diff).astype(jnp.float32)
    else:
        diff = feat.astype(jnp.float32) - centers_b.astype(jnp.float32)
        p = a.astype(jnp.float32) * diff * diff
    if ragged:
        # Ragged last tile: rows >= batch read OOB/stale garbage from the
        # partial block; a *select* (not a multiply) zeroes them so NaN/Inf
        # garbage cannot leak into the reduction.  Emitted only when needed.
        row = (jax.lax.broadcasted_iota(jnp.int32, (p.shape[0], 1), 0)
               + pl.program_id(0) * block_rows)
        p = jnp.where(row < batch, p, 0.0)
    return jnp.sum(p, axis=0, keepdims=True)


def _resident_centers_kernel(label_ref, feat_ref, a_ref, centers_ref, out_ref,
                             *, batch, block_rows, ragged):
    """One (TB, D) row tile; full (C, D) centers table resident in VMEM."""
    feat = feat_ref[...]
    a = a_ref[...]
    centers = centers_ref[...]          # native dtype; upcast hoisted to wrapper
    tb = feat.shape[0]
    c = centers.shape[0]
    # centers[label] for the tile via a one-hot matmul on the otherwise-idle MXU.
    # one-hot 0/1 is exact in bf16 and f32; f32 x f32 lowers to the native
    # multi-pass f32 MXU mode (exact row selection -- verified against the pure
    # JAX reference at 1e-5 in __main__), bf16 centers run at full bf16 MXU rate.
    one_hot = (jax.lax.broadcasted_iota(jnp.int32, (tb, c), 1)
               == label_ref[...]).astype(centers.dtype)              # (TB, C)
    gathered_dtype = (jnp.bfloat16
                      if (centers.dtype == jnp.bfloat16
                          and feat.dtype == jnp.bfloat16
                          and a.dtype == jnp.bfloat16)
                      else jnp.float32)
    centers_b = jnp.dot(one_hot, centers,
                        preferred_element_type=gathered_dtype)       # (TB, D)
    out_ref[...] = _partial_rowsum(feat, a, centers_b, batch=batch,
                                   block_rows=block_rows, ragged=ragged)


def _pregathered_centers_kernel(feat_ref, a_ref, cb_ref, out_ref,
                                *, batch, block_rows, ragged):
    """Fallback: centers[label] pre-gathered in the wrapper and streamed."""
    out_ref[...] = _partial_rowsum(feat_ref[...], a_ref[...], cb_ref[...],
                                   batch=batch, block_rows=block_rows,
                                   ragged=ragged)


# --------------------------------------------------------------------------- #
# wrapper
# --------------------------------------------------------------------------- #
def sparse_center_loss(feat, A, label, centers, size_average=True, *,
                       block_rows=None,
                       max_resident_center_bytes=None,
                       max_resident_classes=4096,
                       single_buffer_centers=True,
                       vmem_limit_bytes=None):
    """Forward pass of SparseCenterLoss. Returns a scalar float32 loss."""
    B = feat.shape[0]
    feat = feat.reshape(B, -1)
    D = feat.shape[1]
    A = A.reshape(B, D)
    C = centers.shape[0]
    if centers.shape[1] != D:
        raise ValueError(
            f"Center's dim {centers.shape[1]} != input feature's dim {D}")
    label = label.reshape(B).astype(jnp.int32)

    # Keep centers in a dtype the kernel consumes directly (hoists the per-step
    # upcast of the resident table out of the grid loop).
    if centers.dtype not in (jnp.float32, jnp.bfloat16):
        centers = centers.astype(jnp.float32)
    centers_bytes = C * D * centers.dtype.itemsize

    # ---- generation-aware VMEM budget (v7x: 64 MiB/TC, v5e/v6e: 128 MiB) ----
    vmem_cap = _vmem_capacity_bytes()
    if vmem_limit_bytes is None:
        vmem_limit_bytes = min(int(vmem_cap * 0.7), 96 * _MIB)
    vmem_limit_bytes = int(vmem_limit_bytes)
    plan_budget = int(vmem_limit_bytes * 0.75)          # headroom for the compiler

    if max_resident_center_bytes is None:
        # ~8-11 MiB on v7x, ~16-22 MiB on v5e/v6e.
        max_resident_center_bytes = plan_budget // 4
    # Gate the resident/MXU path on C as well as bytes: for very large class
    # counts the one-hot matmul would flip the kernel from mem-bound to MXU/VALU
    # bound even if the table fits.
    resident = (centers_bytes <= max_resident_center_bytes
                and C <= max_resident_classes)

    # ---- row-tile size from a combined per-step byte target ----
    per_row_bytes = D * (feat.dtype.itemsize + A.dtype.itemsize)
    if not resident:
        per_row_bytes += D * centers.dtype.itemsize     # centers_batch streamed too
    # Centers table counted double-buffered (conservative even with Buffered(1)).
    stream_budget = max(plan_budget - (2 * centers_bytes if resident else 0),
                        2 * _MIB)
    per_step_target = max(_MIB, min(_MAX_STEP_BYTES, stream_budget // 2))

    min_tiles = 2 if B >= 64 else 1     # give both v7x TensorCores work

    if block_rows is not None:
        block_rows = max(1, int(block_rows))
        if block_rows < B:
            block_rows = max(8, _round_up(block_rows, 8))
        block_rows = min(block_rows, B)
    elif B * per_row_bytes <= per_step_target and min_tiles == 1:
        block_rows = B                  # single full-extent tile, no ragged tail
    else:
        rows = max(32, (per_step_target // max(1, per_row_bytes)) // 32 * 32)
        # keep the double-buffered tile inside the planned stream budget
        rows = min(rows, max(32, (stream_budget // (2 * per_row_bytes)) // 32 * 32))
        # Balance tiles so the ragged tail (masked in-kernel, never padded in
        # HBM) is as small as possible.
        num_tiles = max(min_tiles, pl.cdiv(B, rows))
        block_rows = _round_up(pl.cdiv(B, num_tiles), 32)
        if block_rows >= B:
            block_rows = B

    num_tiles = pl.cdiv(B, block_rows)
    ragged = (B % block_rows) != 0

    row_spec = pl.BlockSpec((block_rows, D), lambda i: (i, 0))
    out_spec = pl.BlockSpec((1, D), lambda i: (i, 0))
    out_shape = jax.ShapeDtypeStruct((num_tiles, D), jnp.float32)
    compiler_params = pltpu.CompilerParams(
        dimension_semantics=("parallel",),      # tiles are fully independent
        vmem_limit_bytes=vmem_limit_bytes,
    )

    if resident:
        kernel = functools.partial(_resident_centers_kernel, batch=B,
                                   block_rows=block_rows, ragged=ragged)
        label2d = label.reshape(B, 1)

        def call(buffer_centers_once):
            # Constant index_map -> the table is DMA'd once; Buffered(1) keeps a
            # single VMEM copy (frees budget, most valuable on v7x's 64 MiB).
            ckw = ({"pipeline_mode": pl.Buffered(1)}
                   if buffer_centers_once else {})
            return pl.pallas_call(
                kernel,
                out_shape=out_shape,
                grid_spec=pltpu.PrefetchScalarGridSpec(
                    num_scalar_prefetch=0,
                    grid=(num_tiles,),
                    in_specs=[
                        pl.BlockSpec((block_rows, 1), lambda i: (i, 0)),  # labels
                        row_spec,                                         # feat
                        row_spec,                                         # A
                        pl.BlockSpec((C, D), lambda i: (0, 0), **ckw),    # centers
                    ],
                    out_specs=out_spec,
                ),
                compiler_params=compiler_params,
            )(label2d, feat, A, centers)

        if single_buffer_centers:
            try:
                partials = call(True)
            except Exception:
                # pipeline_mode=pl.Buffered may be unsupported on this jax
                # version; the VMEM plan already accounts for double buffering.
                partials = call(False)
        else:
            partials = call(False)
    else:
        # Large C: pre-gather centers[label] once in the wrapper and stream it
        # with the same row tiling as feat/A (extra BxD HBM round trip, but no
        # giant resident table / one-hot matmul).
        centers_batch = jnp.take(centers, label, axis=0)
        kernel = functools.partial(_pregathered_centers_kernel, batch=B,
                                   block_rows=block_rows, ragged=ragged)
        partials = pl.pallas_call(
            kernel,
            out_shape=out_shape,
            grid_spec=pltpu.PrefetchScalarGridSpec(
                num_scalar_prefetch=0,
                grid=(num_tiles,),
                in_specs=[row_spec, row_spec, row_spec],
                out_specs=out_spec,
            ),
            compiler_params=compiler_params,
        )(feat, A, centers_batch)

    # Single cross-lane reduce + normalization in the wrapper (no carried
    # accumulator in the kernel, no recompile per batch size).
    total = jnp.sum(partials)
    return total * jnp.float32(0.5) / jnp.float32(B if size_average else 1)


# --------------------------------------------------------------------------- #
# demo / self-test
# --------------------------------------------------------------------------- #
if __name__ == "__main__":
    num_classes, feat_dim, batch = 8, 32, 4

    key = jax.random.PRNGKey(0)
    k_feat, k_a, k_lbl, k_ctr = jax.random.split(key, 4)

    feat = jax.random.normal(k_feat, (batch, feat_dim), dtype=jnp.float32)
    # A is the sparse attention weight in DACL; keep it non-negative like a gate.
    A = jax.nn.sigmoid(jax.random.normal(k_a, (batch, feat_dim), dtype=jnp.float32))
    label = jax.random.randint(k_lbl, (batch,), 0, num_classes, dtype=jnp.int32)
    # Deterministic kaiming_normal_ on centers.t(): fan_in = num_classes.
    centers = jax.random.normal(
        k_ctr, (num_classes, feat_dim), dtype=jnp.float32
    ) * jnp.sqrt(2.0 / num_classes)

    def ref_loss(f, a, lbl, ctr, size_average=True):
        cb = ctr[lbl]
        div = f.shape[0] if size_average else 1.0
        return jnp.sum(a * (f - cb) ** 2) / 2.0 / div

    # 1) Default path: resident centers in VMEM, MXU one-hot gather, single tile.
    loss = jax.block_until_ready(
        sparse_center_loss(feat, A, label, centers, size_average=True))
    ref = ref_loss(feat, A, label, centers)
    assert jnp.allclose(loss, ref, rtol=1e-5, atol=1e-5), (loss, ref)

    # 2) Ragged row tiling (B not a multiple of block_rows) -> in-kernel tail
    #    mask, no jnp.pad of feat/A.
    b2 = 70
    kf2, ka2, kl2 = jax.random.split(jax.random.PRNGKey(1), 3)
    feat2 = jax.random.normal(kf2, (b2, feat_dim), dtype=jnp.float32)
    A2 = jax.nn.sigmoid(jax.random.normal(ka2, (b2, feat_dim), dtype=jnp.float32))
    label2 = jax.random.randint(kl2, (b2,), 0, num_classes, dtype=jnp.int32)
    loss2 = jax.block_until_ready(
        sparse_center_loss(feat2, A2, label2, centers, block_rows=32))
    ref2 = ref_loss(feat2, A2, label2, centers)
    assert jnp.allclose(loss2, ref2, rtol=1e-5, atol=1e-5), (loss2, ref2)

    # 3) Pre-gather fallback (forced), also ragged.
    loss3 = jax.block_until_ready(
        sparse_center_loss(feat2, A2, label2, centers, block_rows=32,
                           max_resident_center_bytes=0))
    assert jnp.allclose(loss3, ref2, rtol=1e-5, atol=1e-5), (loss3, ref2)

    # 4) All-bf16 inputs: native bf16 streaming + bf16 VPU elementwise path
    #    (loss reference computed in f32, so tolerance reflects bf16 math).
    feat_bf = feat.astype(jnp.bfloat16)
    a_bf = A.astype(jnp.bfloat16)
    ctr_bf = centers.astype(jnp.bfloat16)
    loss_bf = jax.block_until_ready(
        sparse_center_loss(feat_bf, a_bf, label, ctr_bf, size_average=True))
    ref_bf = ref_loss(feat_bf.astype(jnp.float32), a_bf.astype(jnp.float32),
                      label, ctr_bf.astype(jnp.float32))
    assert jnp.allclose(loss_bf, ref_bf, rtol=2e-2, atol=1e-2), (loss_bf, ref_bf)

    # 5) size_average=False branch.
    loss_sum = jax.block_until_ready(
        sparse_center_loss(feat, A, label, centers, size_average=False))
    ref_sum = ref_loss(feat, A, label, centers, size_average=False)
    assert jnp.allclose(loss_sum, ref_sum, rtol=1e-5, atol=1e-5), (loss_sum, ref_sum)

    print("KERNEL_OK")
</pallas_src>

<mosaic_0001>
module attributes {stable_mosaic.version = 11 : i64} {
  func.func @_resident_centers_kernel(%arg0: i32, %arg1: memref<4x1xi32, #tpu.memory_space<vmem>>, %arg2: memref<4x32xf32, #tpu.memory_space<vmem>>, %arg3: memref<4x32xf32, #tpu.memory_space<vmem>>, %arg4: memref<8x32xf32, #tpu.memory_space<vmem>>, %arg5: memref<1x32xf32, #tpu.memory_space<vmem>>) attributes {dimension_semantics = [#tpu.dimension_semantics<parallel>], iteration_bounds = array<i64: 1>, scalar_prefetch = 0 : i64, scratch_operands = 0 : i64, tpu.core_type = #tpu.core_type<tc>, window_params = [{transform_indices = @transform_0, window_bounds = array<i64: 4, 1>}, {transform_indices = @transform_1, window_bounds = array<i64: 4, 32>}, {transform_indices = @transform_2, window_bounds = array<i64: 4, 32>}, {pipeline_mode = #tpu.pipeline_mode<synchronous>, transform_indices = @transform_3, window_bounds = array<i64: 8, 32>}, {transform_indices = @transform_4, window_bounds = array<i64: 1, 32>}]} {
    %c0 = arith.constant 0 : index
    %c0_0 = arith.constant 0 : index
    %0 = vector.load %arg2[%c0, %c0_0] : memref<4x32xf32, #tpu.memory_space<vmem>>, vector<4x32xf32>
    %c0_1 = arith.constant 0 : index
    %c0_2 = arith.constant 0 : index
    %1 = vector.load %arg3[%c0_1, %c0_2] : memref<4x32xf32, #tpu.memory_space<vmem>>, vector<4x32xf32>
    %c0_3 = arith.constant 0 : index
    %c0_4 = arith.constant 0 : index
    %2 = vector.load %arg4[%c0_3, %c0_4] : memref<8x32xf32, #tpu.memory_space<vmem>>, vector<8x32xf32>
    %3 = tpu.iota {dimensions = array<i32: 1>} : vector<4x8xi32>
    %c0_5 = arith.constant 0 : index
    %c0_6 = arith.constant 0 : index
    %4 = vector.load %arg1[%c0_5, %c0_6] : memref<4x1xi32, #tpu.memory_space<vmem>>, vector<4x1xi32>
    %5 = vector.broadcast %4 : vector<4x1xi32> to vector<4x8xi32>
    %6 = arith.cmpi eq, %3, %5 : vector<4x8xi32>
    %7 = arith.extui %6 : vector<4x8xi1> to vector<4x8xi32>
    %8 = arith.sitofp %7 : vector<4x8xi32> to vector<4x8xf32>
    %cst = arith.constant dense<0.000000e+00> : vector<4x32xf32>
    %9 = tpu.matmul %8, %2, %cst {dimension_numbers = #tpu.dot_dimension_numbers<[1], [0], [0], [1], [0, 0, 1, 1], [], []>} : vector<4x8xf32>, vector<8x32xf32>, vector<4x32xf32> -> vector<4x32xf32>
    %10 = arith.subf %0, %9 : vector<4x32xf32>
    %11 = arith.mulf %1, %10 : vector<4x32xf32>
    %12 = arith.mulf %11, %10 : vector<4x32xf32>
    %cst_7 = arith.constant dense<0.000000e+00> : vector<32xf32>
    %13 = vector.multi_reduction <add>, %12, %cst_7 [0] : vector<4x32xf32> to vector<32xf32>
    %14 = vector.shape_cast %13 : vector<32xf32> to vector<1x32xf32>
    %c0_8 = arith.constant 0 : index
    %c0_9 = arith.constant 0 : index
    %15 = vector.load %arg5[%c0_8, %c0_9] : memref<1x32xf32, #tpu.memory_space<vmem>>, vector<1x32xf32>
    tpu.vector_store %arg5[%c0_8, %c0_9], %14 {strides = array<i32>} : memref<1x32xf32, #tpu.memory_space<vmem>>, vector<1x32xf32>,
    return
  }
  func.func @transform_0(%arg0: i32) -> (i32, i32) {
    %c0_i32 = arith.constant 0 : i32
    %c0_i32_0 = arith.constant 0 : i32
    return %arg0, %c0_i32 : i32, i32
  }
  func.func @transform_1(%arg0: i32) -> (i32, i32) {
    %c0_i32 = arith.constant 0 : i32
    %c0_i32_0 = arith.constant 0 : i32
    return %arg0, %c0_i32 : i32, i32
  }
  func.func @transform_2(%arg0: i32) -> (i32, i32) {
    %c0_i32 = arith.constant 0 : i32
    %c0_i32_0 = arith.constant 0 : i32
    return %arg0, %c0_i32 : i32, i32
  }
  func.func @transform_3(%arg0: i32) -> (i32, i32) {
    %c0_i32 = arith.constant 0 : i32
    %c0_i32_0 = arith.constant 0 : i32
    %c0_i32_1 = arith.constant 0 : i32
    return %c0_i32, %c0_i32_0 : i32, i32
  }
  func.func @transform_4(%arg0: i32) -> (i32, i32) {
    %c0_i32 = arith.constant 0 : i32
    %c0_i32_0 = arith.constant 0 : i32
    return %arg0, %c0_i32 : i32, i32
  }
}

module attributes {stable_mosaic.version = 11 : i64} {
  func.func @_resident_centers_kernel(%arg0: i32, %arg1: memref<4x1xi32, #tpu.memory_space<vmem>>, %arg2: memref<4x32xf32, #tpu.memory_space<vmem>>, %arg3: memref<4x32xf32, #tpu.memory_space<vmem>>, %arg4: memref<8x32xf32, #tpu.memory_space<vmem>>, %arg5: memref<1x32xf32, #tpu.memory_space<vmem>>) attributes {dimension_semantics = [#tpu.dimension_semantics<parallel>], iteration_bounds = array<i64: 1>, scalar_prefetch = 0 : i64, scratch_operands = 0 : i64, tpu.core_type = #tpu.core_type<tc>, window_params = [{transform_indices = @transform_0, window_bounds = array<i64: 4, 1>}, {transform_indices = @transform_1, window_bounds = array<i64: 4, 32>}, {transform_indices = @transform_2, window_bounds = array<i64: 4, 32>}, {pipeline_mode = #tpu.pipeline_mode<synchronous>, transform_indices = @transform_3, window_bounds = array<i64: 8, 32>}, {transform_indices = @transform_4, window_bounds = array<i64: 1, 32>}]} {
    %c0 = arith.constant 0 : index
    %c0_0 = arith.constant 0 : index
    %0 = vector.load %arg2[%c0, %c0_0] : memref<4x32xf32, #tpu.memory_space<vmem>>, vector<4x32xf32>
    %c0_1 = arith.constant 0 : index
    %c0_2 = arith.constant 0 : index
    %1 = vector.load %arg3[%c0_1, %c0_2] : memref<4x32xf32, #tpu.memory_space<vmem>>, vector<4x32xf32>
    %c0_3 = arith.constant 0 : index
    %c0_4 = arith.constant 0 : index
    %2 = vector.load %arg4[%c0_3, %c0_4] : memref<8x32xf32, #tpu.memory_space<vmem>>, vector<8x32xf32>
    %3 = tpu.iota {dimensions = array<i32: 1>} : vector<4x8xi32>
    %c0_5 = arith.constant 0 : index
    %c0_6 = arith.constant 0 : index
    %4 = vector.load %arg1[%c0_5, %c0_6] : memref<4x1xi32, #tpu.memory_space<vmem>>, vector<4x1xi32>
    %5 = vector.broadcast %4 : vector<4x1xi32> to vector<4x8xi32>
    %6 = arith.cmpi eq, %3, %5 : vector<4x8xi32>
    %7 = arith.extui %6 : vector<4x8xi1> to vector<4x8xi32>
    %8 = arith.sitofp %7 : vector<4x8xi32> to vector<4x8xf32>
    %cst = arith.constant dense<0.000000e+00> : vector<4x32xf32>
    %9 = tpu.matmul %8, %2, %cst {dimension_numbers = #tpu.dot_dimension_numbers<[1], [0], [0], [1], [0, 0, 1, 1], [], []>} : vector<4x8xf32>, vector<8x32xf32>, vector<4x32xf32> -> vector<4x32xf32>
    %10 = arith.subf %0, %9 : vector<4x32xf32>
    %11 = arith.mulf %1, %10 : vector<4x32xf32>
    %12 = arith.mulf %11, %10 : vector<4x32xf32>
    %cst_7 = arith.constant dense<0.000000e+00> : vector<32xf32>
    %13 = vector.multi_reduction <add>, %12, %cst_7 [0] : vector<4x32xf32> to vector<32xf32>
    %14 = vector.shape_cast %13 : vector<32xf32> to vector<1x32xf32>
    %c0_8 = arith.constant 0 : index
    %c0_9 = arith.constant 0 : index
    %15 = vector.load %arg5[%c0_8, %c0_9] : memref<1x32xf32, #tpu.memory_space<vmem>>, vector<1x32xf32>
    tpu.vector_store %arg5[%c0_8, %c0_9], %14 {strides = array<i32>} : memref<1x32xf32, #tpu.memory_space<vmem>>, vector<1x32xf32>,
    return
  }
  func.func @transform_0(%arg0: i32) -> (i32, i32) {
    %c0_i32 = arith.constant 0 : i32
    %c0_i32_0 = arith.constant 0 : i32
    return %arg0, %c0_i32 : i32, i32
  }
  func.func @transform_1(%arg0: i32) -> (i32, i32) {
    %c0_i32 = arith.constant 0 : i32
    %c0_i32_0 = arith.constant 0 : i32
    return %arg0, %c0_i32 : i32, i32
  }
  func.func @transform_2(%arg0: i32) -> (i32, i32) {
    %c0_i32 = arith.constant 0 : i32
    %c0_i32_0 = arith.constant 0 : i32
    return %arg0, %c0_i32 : i32, i32
  }
  func.func @transform_3(%arg0: i32) -> (i32, i32) {
    %c0_i32 = arith.constant 0 : i32
    %c0_i32_0 = arith.constant 0 : i32
    %c0_i32_1 = arith.constant 0 : i32
    return %c0_i32, %c0_i32_0 : i32, i32
  }
  func.func @transform_4(%arg0: i32) -> (i32, i32) {
    %c0_i32 = arith.constant 0 : i32
    %c0_i32_0 = arith.constant 0 : i32
    return %arg0, %c0_i32 : i32, i32
  }
}

</mosaic_0001>

<llo_original>
// kernel: tpu_custom_call.1
$region0: #{tpu_custom_call.1}
  #allocation0 [shape = 'u32[]', space=smem, size = 0x4, offset = 0x4, fixed_abs, tag = 'smem constant byte address 0x4 - core index']
  #allocation1 [shape = 'u32[144,128]{1,0:T(1,128)}', space=vmem, size = 0x12000, scoped, tag = 'internal scratch']
  %s0 = inlined_call_operand.vmem [shape: s32[4,1], index: 0, kind: input, shape index: {}]
  %s1 = inlined_call_operand.hbm [shape: f32[4,32], index: 1, kind: input, shape index: {}]
  %s2 = inlined_call_operand.hbm [shape: f32[4,32], index: 2, kind: input, shape index: {}]
  %s3 = inlined_call_operand.vmem [shape: f32[8,32], index: 3, kind: input, shape index: {}]
  %s4 = inlined_call_operand.hbm [shape: f32[1,32], index: 4, kind: output, shape index: {}]
  %s5 = sld [smem:[#allocation0]]
  $region34: #{tpu_custom_call.1} parent=0
    _
  %s7 = ssub.s32 1, %s5
  %s8 = scalar_select 0, %s7, %s5
  $region1: #{tpu_custom_call.1} parent=0
    #allocation2 [shape = 'u8[2048]{0}', space=vmem, size = 0x800, scoped, tag = 'input window, operand 1, single buffered']
    #allocation3 [shape = 's32[1]{0}', space=sflag, size = 0x4, scoped, tag = 'scoped memory for tpu_custom_call.1']
    #allocation4 [shape = 's32[1]{0}', space=sflag, size = 0x4, scoped, tag = 'scoped memory for tpu_custom_call.1']
    #allocation5 [shape = 'u8[2048]{0}', space=vmem, size = 0x800, scoped, tag = 'input window, operand 2, single buffered']
    #allocation6 [shape = 's32[1]{0}', space=sflag, size = 0x4, scoped, tag = 'scoped memory for tpu_custom_call.1']
    #allocation7 [shape = 'u8[512]{0}', space=vmem, size = 0x400, scoped, tag = 'output window, operand 0, single buffered']
    %9 = vsyncpa [#allocation3], 0
    %10 = vsyncpa [#allocation6], 0
    %11 = vsyncpa [#allocation4], 0
    // Predicated region
    $region2: #{tpu_custom_call.1} parent=1 // pred_check
      _
    $region3: #{tpu_custom_call.1} parent=1 // pred_check_branch
      %13 = sbr.rel (0) target = $region5
    $region4: #{tpu_custom_call.1} parent=1 // pred_region
      _
    $region5: #{tpu_custom_call.1} parent=1 // pred_fallthru
      _
    // Predicated region
    $region6: #{tpu_custom_call.1} parent=1 // pred_check
      _
    $region7: #{tpu_custom_call.1} parent=1 // pred_check_branch
      %15 = sbr.rel (0) target = $region9
    $region8: #{tpu_custom_call.1} parent=1 // pred_region
      %s17 = ssub.s32 64, 64
      %18 = vsyncadd [#allocation3], %s17
      %s20 = sshll.u32 [#allocation2], 4
      %s21 = int_to_ptr.vmem [resolvable:$true] %s20
      %23 = dma.hbm_to_vmem [thread:$0]  %s1, 64, %s21, [#allocation3]
    $region9: #{tpu_custom_call.1} parent=1 // pred_fallthru
      _
    // Predicated region
    $region10: #{tpu_custom_call.1} parent=1 // pred_check
      _
    $region11: #{tpu_custom_call.1} parent=1 // pred_check_branch
      %25 = sbr.rel (0) target = $region13
    $region12: #{tpu_custom_call.1} parent=1 // pred_region
      %s27 = ssub.s32 64, 64
      %28 = vsyncadd [#allocation6], %s27
      %s30 = sshll.u32 [#allocation5], 4
      %s31 = int_to_ptr.vmem [resolvable:$true] %s30
      %33 = dma.hbm_to_vmem [thread:$0]  %s2, 64, %s31, [#allocation6]
    $region13: #{tpu_custom_call.1} parent=1 // pred_fallthru
      _
    // Predicated region
    $region14: #{tpu_custom_call.1} parent=1 // pred_check
      _
    $region15: #{tpu_custom_call.1} parent=1 // pred_check_branch
      %35 = sbr.rel (0) target = $region17
    $region16: #{tpu_custom_call.1} parent=1 // pred_region
      _
    $region17: #{tpu_custom_call.1} parent=1 // pred_fallthru
      _
    // Predicated region
    $region18: #{tpu_custom_call.1} parent=1 // pred_check
      _
    $region19: #{tpu_custom_call.1} parent=1 // pred_check_branch
      %37 = sbr.rel (0) target = $region21
    $region20: #{tpu_custom_call.1} parent=1 // pred_region
      %38 = dma.done [#allocation3], 64
    $region21: #{tpu_custom_call.1} parent=1 // pred_fallthru
      _
    // Predicated region
    $region22: #{tpu_custom_call.1} parent=1 // pred_check
      _
    $region23: #{tpu_custom_call.1} parent=1 // pred_check_branch
      %40 = sbr.rel (0) target = $region25
    $region24: #{tpu_custom_call.1} parent=1 // pred_region
      %41 = dma.done [#allocation6], 64
    $region25: #{tpu_custom_call.1} parent=1 // pred_fallthru
      _
    %v42 = vld [vmem:[#allocation2] sm:$0xf]
    %v43 = vld [vmem:[#allocation5] sm:$0xf]
    %v44 = vld [vmem:[%s3] sm:$0xff]
    %v45 = vlaneseq
    %v46 = vand.u32 %v45, 127
    %v47 = vld [vmem:[%s0] sm:$0xf]
    %48 = vset.pattern.permute.xlu0 0
    %49 = vperm.xlu0 %48, %v47
    %v50 = vpop.permute.xlu0 %49
    %vm51 = vcmp.eq.s32.totalorder %v46, %v50
    %v52 = vsel %vm51, 1, 0
    %v53 = vcvt.s32.f32 %v52
    %vm54 = vcmask 64512
    %v56 = vsel %vm54, %v53, 0
    %58 = vmatprep.subr.mxu0 0.0
    %59 = vmatpush1.msra.mxu0 0.0
    %60 = vmatprep.subr.mxu0 0.0
    %61 = vmatpush1.msra.mxu0 0.0
    %62 = vmatprep.subr.mxu0 0.0
    %63 = vmatpush1.msra.mxu0 0.0
    %64 = vmatprep.subr.mxu0 0.0
    %65 = vmatpush1.msra.mxu0 0.0
    %66 = vmatprep.subr.mxu0 0.0
    %67 = vmatpush1.msra.mxu0 0.0
    %68 = vmatprep.subr.mxu0 0.0
    %69 = vmatpush1.msra.mxu0 0.0
    %70 = vmatprep.subr.mxu0 0.0
    %71 = vmatpush1.msra.mxu0 0.0
    %72 = vmatprep.subr.mxu0 0.0
    %73 = vmatpush1.msra.mxu0 0.0
    %74 = vmatprep.subr.mxu0 0.0
    %75 = vmatpush1.msra.mxu0 0.0
    %76 = vmatprep.subr.mxu0 0.0
    %77 = vmatpush1.msra.mxu0 0.0
    %78 = vmatprep.subr.mxu0 0.0
    %79 = vmatpush1.msra.mxu0 0.0
    %80 = vmatprep.subr.mxu0 0.0
    %81 = vmatpush1.msra.mxu0 0.0
    %82 = vmatprep.subr.mxu0 0.0
    %83 = vmatpush1.msra.mxu0 0.0
    %84 = vmatprep.subr.mxu0 0.0
    %85 = vmatpush1.msra.mxu0 0.0
    %86 = vmatprep.subr.mxu0 0.0
    %87 = vmatpush1.msra.mxu0 0.0
    %88 = vmatprep.subr.mxu0 0.0
    %89 = vmatpush1.msra.mxu0 %v44
    %90 = vmatprep.subr.mxu0 0.0
    %91 = vmatpush2.msra.mxu0 0.0
    %92 = vmatprep.subr.mxu0 0.0
    %93 = vmatpush2.msra.mxu0 0.0
    %94 = vmatprep.subr.mxu0 0.0
    %95 = vmatpush2.msra.mxu0 0.0
    %96 = vmatprep.subr.mxu0 0.0
    %97 = vmatpush2.msra.mxu0 0.0
    %98 = vmatprep.subr.mxu0 0.0
    %99 = vmatpush2.msra.mxu0 0.0
    %100 = vmatprep.subr.mxu0 0.0
    %101 = vmatpush2.msra.mxu0 0.0
    %102 = vmatprep.subr.mxu0 0.0
    %103 = vmatpush2.msra.mxu0 0.0
    %104 = vmatprep.subr.mxu0 0.0
    %105 = vmatpush2.msra.mxu0 0.0
    %106 = vmatprep.subr.mxu0 0.0
    %107 = vmatpush2.msra.mxu0 0.0
    %108 = vmatprep.subr.mxu0 0.0
    %109 = vmatpush2.msra.mxu0 0.0
    %110 = vmatprep.subr.mxu0 0.0
    %111 = vmatpush2.msra.mxu0 0.0
    %112 = vmatprep.subr.mxu0 0.0
    %113 = vmatpush2.msra.mxu0 0.0
    %114 = vmatprep.subr.mxu0 0.0
    %115 = vmatpush2.msra.mxu0 0.0
    %116 = vmatprep.subr.mxu0 0.0
    %117 = vmatpush2.msra.mxu0 0.0
    %118 = vmatprep.subr.mxu0 0.0
    %119 = vmatpush2.msra.mxu0 0.0
    %120 = vmatprep.subr.mxu0 0.0
    %121 = vmatpush2.msra.mxu0 0.0
    %122 = vmatprep.mubr.f32.mxu0 0.0
    %123 = vmatmul.mubr.f32.gmra.mxu0 %v56
    %v124 = vpop.f32.mrf.mxu0
    %v125 = vadd.f32 0.0, %v124
    %v126 = vpop.f32.mrf.mxu0
    %127 = vdwg.mxu0
    %v128 = vsub.f32 %v42, %v125
    %v129 = vmul.f32 %v43, %v128
    %v130 = vmul.f32 %v129, %v128
    %vm131 = vcmask 257024
    %v132 = vsel %vm131, %v130, 0.0
    %v133 = vrot.slane %v132, 4
    %v134 = vadd.f32 %v132, %v133
    %v135 = vrot.slane %v134, 2
    %v136 = vadd.f32 %v134, %v135
    %v137 = vrot.slane %v136, 1
    %v138 = vadd.f32 %v136, %v137
    %vm139 = vcmask 253952
    %140 = vst.msk [vmem:[#allocation7] sm:$0x1] %vm139, %v138
    // Predicated region
    $region26: #{tpu_custom_call.1} parent=1 // pred_check
      _
    $region27: #{tpu_custom_call.1} parent=1 // pred_check_branch
      %142 = sbr.rel (0) target = $region29
    $region28: #{tpu_custom_call.1} parent=1 // pred_region
      %s144 = ssub.s32 16, 16
      %145 = vsyncadd [#allocation4], %s144
      %s147 = sshll.u32 [#allocation7], 4
      %s148 = int_to_ptr.vmem [resolvable:$true] %s147
      %150 = dma.vmem_to_hbm [thread:$0]  %s148, 16, %s4, [#allocation4]
    $region29: #{tpu_custom_call.1} parent=1 // pred_fallthru
      _
    // Predicated region
    $region30: #{tpu_custom_call.1} parent=1 // pred_check
      _
    $region31: #{tpu_custom_call.1} parent=1 // pred_check_branch
      %152 = sbr.rel (0) target = $region33
    $region32: #{tpu_custom_call.1} parent=1 // pred_region
      %153 = dma.done [#allocation4], 16
    $region33: #{tpu_custom_call.1} parent=1 // pred_fallthru
      _
    %154 = vsyncpa [#allocation3], 1
    %155 = vsyncpa [#allocation6], 1
    %156 = vsyncpa [#allocation4], 1

// kernel: tpu_custom_call.1
$region0: #{tpu_custom_call.1}
  #allocation0 [shape = 'u32[]', space=smem, size = 0x4, offset = 0x4, fixed_abs, tag = 'smem constant byte address 0x4 - core index']
  #allocation1 [shape = 'u32[144,128]{1,0:T(1,128)}', space=vmem, size = 0x12000, scoped, tag = 'internal scratch']
  %s0 = inlined_call_operand.vmem [shape: s32[4,1], index: 0, kind: input, shape index: {}]
  %s1 = inlined_call_operand.hbm [shape: f32[4,32], index: 1, kind: input, shape index: {}]
  %s2 = inlined_call_operand.hbm [shape: f32[4,32], index: 2, kind: input, shape index: {}]
  %s3 = inlined_call_operand.vmem [shape: f32[8,32], index: 3, kind: input, shape index: {}]
  %s4 = inlined_call_operand.hbm [shape: f32[1,32], index: 4, kind: output, shape index: {}]
  %s5 = sld [smem:[#allocation0]]
  $region34: #{tpu_custom_call.1} parent=0
    _
  %s7 = ssub.s32 1, %s5
  %s8 = scalar_select 0, %s7, %s5
  $region1: #{tpu_custom_call.1} parent=0
    #allocation2 [shape = 'u8[2048]{0}', space=vmem, size = 0x800, scoped, tag = 'input window, operand 1, single buffered']
    #allocation3 [shape = 's32[1]{0}', space=sflag, size = 0x4, scoped, tag = 'scoped memory for tpu_custom_call.1']
    #allocation4 [shape = 's32[1]{0}', space=sflag, size = 0x4, scoped, tag = 'scoped memory for tpu_custom_call.1']
    #allocation5 [shape = 'u8[2048]{0}', space=vmem, size = 0x800, scoped, tag = 'input window, operand 2, single buffered']
    #allocation6 [shape = 's32[1]{0}', space=sflag, size = 0x4, scoped, tag = 'scoped memory for tpu_custom_call.1']
    #allocation7 [shape = 'u8[512]{0}', space=vmem, size = 0x400, scoped, tag = 'output window, operand 0, single buffered']
    %9 = vsyncpa [#allocation3], 0
    %10 = vsyncpa [#allocation6], 0
    %11 = vsyncpa [#allocation4], 0
    // Predicated region
    $region2: #{tpu_custom_call.1} parent=1 // pred_check
      _
    $region3: #{tpu_custom_call.1} parent=1 // pred_check_branch
      %13 = sbr.rel (0) target = $region5
    $region4: #{tpu_custom_call.1} parent=1 // pred_region
      _
    $region5: #{tpu_custom_call.1} parent=1 // pred_fallthru
      _
    // Predicated region
    $region6: #{tpu_custom_call.1} parent=1 // pred_check
      _
    $region7: #{tpu_custom_call.1} parent=1 // pred_check_branch
      %15 = sbr.rel (0) target = $region9
    $region8: #{tpu_custom_call.1} parent=1 // pred_region
      %s17 = ssub.s32 64, 64
      %18 = vsyncadd [#allocation3], %s17
      %s20 = sshll.u32 [#allocation2], 4
      %s21 = int_to_ptr.vmem [resolvable:$true] %s20
      %23 = dma.hbm_to_vmem [thread:$0]  %s1, 64, %s21, [#allocation3]
    $region9: #{tpu_custom_call.1} parent=1 // pred_fallthru
      _
    // Predicated region
    $region10: #{tpu_custom_call.1} parent=1 // pred_check
      _
    $region11: #{tpu_custom_call.1} parent=1 // pred_check_branch
      %25 = sbr.rel (0) target = $region13
    $region12: #{tpu_custom_call.1} parent=1 // pred_region
      %s27 = ssub.s32 64, 64
      %28 = vsyncadd [#allocation6], %s27
      %s30 = sshll.u32 [#allocation5], 4
      %s31 = int_to_ptr.vmem [resolvable:$true] %s30
      %33 = dma.hbm_to_vmem [thread:$0]  %s2, 64, %s31, [#allocation6]
    $region13: #{tpu_custom_call.1} parent=1 // pred_fallthru
      _
    // Predicated region
    $region14: #{tpu_custom_call.1} parent=1 // pred_check
      _
    $region15: #{tpu_custom_call.1} parent=1 // pred_check_branch
      %35 = sbr.rel (0) target = $region17
    $region16: #{tpu_custom_call.1} parent=1 // pred_region
      _
    $region17: #{tpu_custom_call.1} parent=1 // pred_fallthru
      _
    // Predicated region
    $region18: #{tpu_custom_call.1} parent=1 // pred_check
      _
    $region19: #{tpu_custom_call.1} parent=1 // pred_check_branch
      %37 = sbr.rel (0) target = $region21
    $region20: #{tpu_custom_call.1} parent=1 // pred_region
      %38 = dma.done [#allocation3], 64
    $region21: #{tpu_custom_call.1} parent=1 // pred_fallthru
      _
    // Predicated region
    $region22: #{tpu_custom_call.1} parent=1 // pred_check
      _
    $region23: #{tpu_custom_call.1} parent=1 // pred_check_branch
      %40 = sbr.rel (0) target = $region25
    $region24: #{tpu_custom_call.1} parent=1 // pred_region
      %41 = dma.done [#allocation6], 64
    $region25: #{tpu_custom_call.1} parent=1 // pred_fallthru
      _
    %v42 = vld [vmem:[#allocation2] sm:$0xf]
    %v43 = vld [vmem:[#allocation5] sm:$0xf]
    %v44 = vld [vmem:[%s3] sm:$0xff]
    %v45 = vlaneseq
    %v46 = vand.u32 %v45, 127
    %v47 = vld [vmem:[%s0] sm:$0xf]
    %48 = vset.pattern.permute.xlu0 0
    %49 = vperm.xlu0 %48, %v47
    %v50 = vpop.permute.xlu0 %49
    %vm51 = vcmp.eq.s32.totalorder %v46, %v50
    %v52 = vsel %vm51, 1, 0
    %v53 = vcvt.s32.f32 %v52
    %vm54 = vcmask 64512
    %v56 = vsel %vm54, %v53, 0
    %58 = vmatprep.subr.mxu0 0.0
    %59 = vmatpush1.msra.mxu0 0.0
    %60 = vmatprep.subr.mxu0 0.0
    %61 = vmatpush1.msra.mxu0 0.0
    %62 = vmatprep.subr.mxu0 0.0
    %63 = vmatpush1.msra.mxu0 0.0
    %64 = vmatprep.subr.mxu0 0.0
    %65 = vmatpush1.msra.mxu0 0.0
    %66 = vmatprep.subr.mxu0 0.0
    %67 = vmatpush1.msra.mxu0 0.0
    %68 = vmatprep.subr.mxu0 0.0
    %69 = vmatpush1.msra.mxu0 0.0
    %70 = vmatprep.subr.mxu0 0.0
    %71 = vmatpush1.msra.mxu0 0.0
    %72 = vmatprep.subr.mxu0 0.0
    %73 = vmatpush1.msra.mxu0 0.0
    %74 = vmatprep.subr.mxu0 0.0
    %75 = vmatpush1.msra.mxu0 0.0
    %76 = vmatprep.subr.mxu0 0.0
    %77 = vmatpush1.msra.mxu0 0.0
    %78 = vmatprep.subr.mxu0 0.0
    %79 = vmatpush1.msra.mxu0 0.0
    %80 = vmatprep.subr.mxu0 0.0
    %81 = vmatpush1.msra.mxu0 0.0
    %82 = vmatprep.subr.mxu0 0.0
    %83 = vmatpush1.msra.mxu0 0.0
    %84 = vmatprep.subr.mxu0 0.0
    %85 = vmatpush1.msra.mxu0 0.0
    %86 = vmatprep.subr.mxu0 0.0
    %87 = vmatpush1.msra.mxu0 0.0
    %88 = vmatprep.subr.mxu0 0.0
    %89 = vmatpush1.msra.mxu0 %v44
    %90 = vmatprep.subr.mxu0 0.0
    %91 = vmatpush2.msra.mxu0 0.0
    %92 = vmatprep.subr.mxu0 0.0
    %93 = vmatpush2.msra.mxu0 0.0
    %94 = vmatprep.subr.mxu0 0.0
    %95 = vmatpush2.msra.mxu0 0.0
    %96 = vmatprep.subr.mxu0 0.0
    %97 = vmatpush2.msra.mxu0 0.0
    %98 = vmatprep.subr.mxu0 0.0
    %99 = vmatpush2.msra.mxu0 0.0
    %100 = vmatprep.subr.mxu0 0.0
    %101 = vmatpush2.msra.mxu0 0.0
    %102 = vmatprep.subr.mxu0 0.0
    %103 = vmatpush2.msra.mxu0 0.0
    %104 = vmatprep.subr.mxu0 0.0
    %105 = vmatpush2.msra.mxu0 0.0
    %106 = vmatprep.subr.mxu0 0.0
    %107 = vmatpush2.msra.mxu0 0.0
    %108 = vmatprep.subr.mxu0 0.0
    %109 = vmatpush2.msra.mxu0 0.0
    %110 = vmatprep.subr.mxu0 0.0
    %111 = vmatpush2.msra.mxu0 0.0
    %112 = vmatprep.subr.mxu0 0.0
    %113 = vmatpush2.msra.mxu0 0.0
    %114 = vmatprep.subr.mxu0 0.0
    %115 = vmatpush2.msra.mxu0 0.0
    %116 = vmatprep.subr.mxu0 0.0
    %117 = vmatpush2.msra.mxu0 0.0
    %118 = vmatprep.subr.mxu0 0.0
    %119 = vmatpush2.msra.mxu0 0.0
    %120 = vmatprep.subr.mxu0 0.0
    %121 = vmatpush2.msra.mxu0 0.0
    %122 = vmatprep.mubr.f32.mxu0 0.0
    %123 = vmatmul.mubr.f32.gmra.mxu0 %v56
    %v124 = vpop.f32.mrf.mxu0
    %v125 = vadd.f32 0.0, %v124
    %v126 = vpop.f32.mrf.mxu0
    %127 = vdwg.mxu0
    %v128 = vsub.f32 %v42, %v125
    %v129 = vmul.f32 %v43, %v128
    %v130 = vmul.f32 %v129, %v128
    %vm131 = vcmask 257024
    %v132 = vsel %vm131, %v130, 0.0
    %v133 = vrot.slane %v132, 4
    %v134 = vadd.f32 %v132, %v133
    %v135 = vrot.slane %v134, 2
    %v136 = vadd.f32 %v134, %v135
    %v137 = vrot.slane %v136, 1
    %v138 = vadd.f32 %v136, %v137
    %vm139 = vcmask 253952
    %140 = vst.msk [vmem:[#allocation7] sm:$0x1] %vm139, %v138
    // Predicated region
    $region26: #{tpu_custom_call.1} parent=1 // pred_check
      _
    $region27: #{tpu_custom_call.1} parent=1 // pred_check_branch
      %142 = sbr.rel (0) target = $region29
    $region28: #{tpu_custom_call.1} parent=1 // pred_region
      %s144 = ssub.s32 16, 16
      %145 = vsyncadd [#allocation4], %s144
      %s147 = sshll.u32 [#allocation7], 4
      %s148 = int_to_ptr.vmem [resolvable:$true] %s147
      %150 = dma.vmem_to_hbm [thread:$0]  %s148, 16, %s4, [#allocation4]
    $region29: #{tpu_custom_call.1} parent=1 // pred_fallthru
      _
    // Predicated region
    $region30: #{tpu_custom_call.1} parent=1 // pred_check
      _
    $region31: #{tpu_custom_call.1} parent=1 // pred_check_branch
      %152 = sbr.rel (0) target = $region33
    $region32: #{tpu_custom_call.1} parent=1 // pred_region
      %153 = dma.done [#allocation4], 16
    $region33: #{tpu_custom_call.1} parent=1 // pred_fallthru
      _
    %154 = vsyncpa [#allocation3], 1
    %155 = vsyncpa [#allocation6], 1
    %156 = vsyncpa [#allocation4], 1

</llo_original>
